<compile_context>
chip_gen: v5e
topology: v5e:2x2
jax: 0.10.0
libtpu: 0.0.40
codegen_flags: <defaults>
</compile_context>

<pallas_src>
import functools

import jax
import jax.numpy as jnp
import numpy as np
from jax.experimental import pallas as pl
from jax.experimental.pallas import tpu as pltpu

LANE = 128
SUBLANE_PACK = 32                       # int8 targets pack 32 rows / sublane tile
VMEM_BLOCK_BUDGET = 12 * 1024 * 1024    # double-buffered block bytes (fits all gens)
MIN_ROWS_PER_TILE = 256                 # prefer >=256 rows of 128 lanes per tile


def _tversky_kernel(inp_ref, tgt_ref, out_ref, acc_pg, acc_p, acc_g, *,
                    cls_per_block, alpha, beta, gamma, eps):
    """grid = (num_class_blocks, num_spatial_tiles); Cb classes x one tile / step."""
    t = pl.program_id(1)

    @pl.when(t == 0)
    def _():
        acc_pg[...] = jnp.zeros_like(acc_pg)
        acc_p[...] = jnp.zeros_like(acc_p)
        acc_g[...] = jnp.zeros_like(acc_g)

    # Unpack the int8 target tile to int32 once per grid step; every class in
    # the block reuses it (amortizes both the DMA and the unpack).
    tgt = tgt_ref[:, 0].astype(jnp.int32)                 # (B, T, 128)
    c0 = pl.program_id(0) * cls_per_block

    for j in range(cls_per_block):                        # static unroll, Cb is small
        # input_idx = cat((1 - p, p), dim=1); argmax over that dim == (p > 0.5)
        label = inp_ref[:, j] > 0.5                       # (B, T, 128) bool
        tgt_j = tgt == (c0 + j)                           # (B, T, 128) bool
        both = jnp.logical_and(label, tgt_j)
        # Lane-shaped partial sums: reduce only over the sublane (T) axis here
        # (mostly plain vadds across vregs); the cross-lane reduce happens once
        # at finalize.  Also keeps counts exact for arbitrarily large images.
        acc_pg[j] += jnp.sum(both.astype(jnp.float32), axis=1)    # (B, 128)
        acc_p[j] += jnp.sum(label.astype(jnp.float32), axis=1)    # (B, 128)
        acc_g[j] += jnp.sum(tgt_j.astype(jnp.float32), axis=1)    # (B, 128)

    @pl.when(t == pl.num_programs(1) - 1)
    def _():
        P_G = jnp.sum(acc_pg[...], axis=-1)               # (Cb, B) sum(label * tgt)
        P = jnp.sum(acc_p[...], axis=-1)                  # (Cb, B) sum(label)
        G = jnp.sum(acc_g[...], axis=-1)                  # (Cb, B) sum(tgt)
        P_NG = P - P_G                                    # sum(label * (1 - tgt))
        NP_G = G - P_G                                    # sum((1 - label) * tgt)
        index = P_G / (P_G + alpha * P_NG + beta * NP_G + eps)
        base = 1.0 - index
        if gamma == 1.0:                                  # static: skip transcendental
            loss = base
        else:
            loss = jnp.power(base, 1.0 / gamma)
        out_ref[...] = loss[None].astype(out_ref.dtype)   # (1, Cb, B)


def _round_up(x, m):
    return -(-x // m) * m


def _plan_blocks(B, C, HW, itemsize, tgt_itemsize, max_rows_per_tile=None):
    """Pick (classes per block, #class blocks, rows per spatial tile, #tiles)."""
    row_bytes_cls = 2 * B * LANE * itemsize               # per class, double-buffered
    row_bytes_tgt = 2 * B * LANE * tgt_itemsize

    # Widest class block that still leaves room for a decent spatial tile.
    cb_max = ((VMEM_BLOCK_BUDGET // MIN_ROWS_PER_TILE) - row_bytes_tgt) // row_bytes_cls
    if cb_max < min(C, 4):
        # Big batches: trade tile height for class-block width (keeps the
        # target re-read amortized, which is the dominant traffic lever).
        cb_max = ((VMEM_BLOCK_BUDGET // 64) - row_bytes_tgt) // row_bytes_cls
    cb_max = int(max(1, min(C, cb_max)))
    n_cb = -(-C // cb_max)
    if n_cb == 1 and C >= 2:
        # Expose a parallel grid axis for multi-TensorCore chips (v7x); costs
        # only one extra (tiny, int8) pass over the targets.
        n_cb = 2
    cb = -(-C // n_cb)                                     # balanced class blocks

    # Spatial tiling (rows of 128 lanes), balanced tiles.
    rows_needed = -(-HW // LANE)
    row_bytes = cb * row_bytes_cls + row_bytes_tgt
    if max_rows_per_tile is not None:
        max_rows = max(SUBLANE_PACK,
                       (int(max_rows_per_tile) // SUBLANE_PACK) * SUBLANE_PACK)
    else:
        max_rows = max(SUBLANE_PACK,
                       (int(VMEM_BLOCK_BUDGET // row_bytes) // SUBLANE_PACK)
                       * SUBLANE_PACK)
    if rows_needed <= max_rows:
        t_rows, n_hw = rows_needed, 1
    else:
        n_hw = -(-rows_needed // max_rows)                 # tile count first ...
        t_rows = _round_up(-(-rows_needed // n_hw), SUBLANE_PACK)   # ... then size
        n_hw = -(-rows_needed // t_rows)
    return cb, n_cb, t_rows, n_hw


def multi_tversky_loss(inputs, targets, *, alpha=0.5, beta=0.5, gamma=1.0,
                       reduction="mean", weights=None, max_rows_per_tile=None):
    """inputs: (B, C, H, W) float probabilities; targets: (B, H, W) int labels."""
    B, C, H, W = inputs.shape
    HW = H * W

    # Same alpha/beta normalization as FocalBinaryTverskyFunc.__init__.
    s = alpha + beta
    if s != 1.0:
        alpha, beta = alpha / s, beta / s

    if weights is None:
        weights = [1.0 / C] * C
    assert len(weights) == C, "number of classes should be equal to length of weights"
    w = jnp.asarray(weights, dtype=jnp.float32)            # (C,)

    # Minimal HBM traffic: f32/bf16 stay native; narrower floats go to bf16.
    if inputs.dtype in (jnp.float32, jnp.bfloat16):
        pass
    elif jnp.issubdtype(inputs.dtype, jnp.floating) and jnp.dtype(inputs.dtype).itemsize <= 2:
        inputs = inputs.astype(jnp.bfloat16)
    else:
        inputs = inputs.astype(jnp.float32)
    tgt_dtype = jnp.int8 if C <= 127 else jnp.int32
    itemsize = jnp.dtype(inputs.dtype).itemsize
    tgt_itemsize = jnp.dtype(tgt_dtype).itemsize

    cb, n_cb, T, n_hw = _plan_blocks(B, C, HW, itemsize, tgt_itemsize, max_rows_per_tile)
    S = T * n_hw                                            # padded rows of 128 lanes
    HWp = S * LANE
    C_pad = n_cb * cb                                       # >= C; extras are discarded

    inp3 = inputs.reshape(B, C, HW)                         # free reshape, no transpose
    tgt2 = targets.astype(tgt_dtype).reshape(B, HW)
    if HWp != HW:
        # One-off pad only when H*W is not lane/tile aligned: padded inputs are 0
        # (label=0) and padded targets are -1 (never equal to any class).
        inp3 = jnp.pad(inp3, ((0, 0), (0, 0), (0, HWp - HW)))
        tgt2 = jnp.pad(tgt2, ((0, 0), (0, HWp - HW)), constant_values=-1)
    inp4 = inp3.reshape(B, C, S, LANE)                      # (B, C, S, 128)
    tgt4 = tgt2.reshape(B, 1, S, LANE)                      # (B, 1, S, 128)

    kernel = functools.partial(
        _tversky_kernel, cls_per_block=cb,
        alpha=float(alpha), beta=float(beta), gamma=float(gamma), eps=1e-6)

    block_bytes = 2 * (B * cb * T * LANE * itemsize + B * T * LANE * tgt_itemsize)
    vmem_limit = int(min(60 << 20, max(32 << 20, block_bytes + (4 << 20))))
    cost = pl.CostEstimate(
        flops=9 * B * C_pad * HWp,
        transcendentals=0 if gamma == 1.0 else C_pad * B,
        bytes_accessed=B * C * HWp * itemsize + n_cb * B * HWp * tgt_itemsize + C_pad * B * 4)

    # NOTE: when C % cb != 0 the last class block reads past C (ragged block);
    # Pallas clamps the DMA and the garbage only lands in padded-class outputs,
    # which are sliced off below.
    out = pl.pallas_call(
        kernel,
        out_shape=jax.ShapeDtypeStruct((n_cb, cb, B), jnp.float32),
        grid=(n_cb, n_hw),
        in_specs=[
            pl.BlockSpec((B, cb, T, LANE), lambda c, t: (0, c, t, 0)),  # Cb classes/step
            pl.BlockSpec((B, 1, T, LANE), lambda c, t: (0, 0, t, 0)),   # targets tile
        ],
        out_specs=pl.BlockSpec((1, cb, B), lambda c, t: (c, 0, 0)),     # per-class losses
        scratch_shapes=[pltpu.VMEM((cb, B, LANE), jnp.float32)] * 3,
        compiler_params=pltpu.CompilerParams(
            dimension_semantics=("parallel", "arbitrary"),
            vmem_limit_bytes=vmem_limit),
        cost_estimate=cost,
    )(inp4, tgt4)

    per_class = out.reshape(C_pad, B)[:C]                   # (C, B)
    if reduction == "mean":
        red = jnp.mean(per_class, axis=1)                   # (C,)
    elif reduction == "sum":
        red = jnp.sum(per_class, axis=1)                    # (C,)
    elif reduction == "none":
        red = per_class                                     # (C, B)
    else:
        raise ValueError(f"unknown reduction: {reduction}")
    # weight_losses = sum_c weights[c] * loss_c
    return jnp.tensordot(w, red, axes=([0], [0]))

# TODO(synk): only the forward pass is implemented; the module's custom autograd
# backward (FocalBinaryTverskyFunc.backward) is not translated.


def _reference(inputs, targets, alpha, beta, gamma, weights=None, reduction="mean"):
    """Pure-JAX replica of the PyTorch forward."""
    B, C = inputs.shape[0], inputs.shape[1]
    s = alpha + beta
    if s != 1.0:
        alpha, beta = alpha / s, beta / s
    if weights is None:
        weights = [1.0 / C] * C
    total = 0.0
    tgt_flat = targets.reshape(B, -1)
    for c in range(C):
        p = inputs[:, c].reshape(B, -1).astype(jnp.float32)
        label = (p > 0.5).astype(jnp.float32)
        tgt = (tgt_flat == c).astype(jnp.float32)
        P_G = jnp.sum(label * tgt, axis=1)
        P_NG = jnp.sum(label * (1.0 - tgt), axis=1)
        NP_G = jnp.sum((1.0 - label) * tgt, axis=1)
        idx = P_G / (P_G + alpha * P_NG + beta * NP_G + 1e-6)
        loss = jnp.power(1.0 - idx, 1.0 / gamma)
        if reduction == "mean":
            loss = jnp.mean(loss)
        elif reduction == "sum":
            loss = jnp.sum(loss)
        total = total + loss * weights[c]
    return total


if __name__ == "__main__":
    key = jax.random.PRNGKey(0)

    # Test 1: module-default config, (B, C, H, W) = (2, 4, 16, 16).
    k1, k2 = jax.random.split(key)
    x1 = jax.random.uniform(k1, (2, 4, 16, 16), dtype=jnp.float32)
    t1 = jax.random.randint(k2, (2, 16, 16), 0, 4, dtype=jnp.int32)
    got1 = jax.block_until_ready(multi_tversky_loss(x1, t1))
    ref1 = jax.block_until_ready(_reference(x1, t1, 0.5, 0.5, 1.0))
    assert np.allclose(np.asarray(got1), np.asarray(ref1), rtol=1e-5, atol=1e-5), (
        float(got1), float(ref1))

    # Test 2: odd class count (ragged class block), non-lane-aligned spatial
    # size (padding path), alpha/beta normalization, gamma != 1, class weights.
    k3, k4 = jax.random.split(k1)
    x2 = jax.random.uniform(k3, (2, 3, 10, 10), dtype=jnp.float32)
    t2 = jax.random.randint(k4, (2, 10, 10), 0, 3, dtype=jnp.int32)
    wts = [0.2, 0.3, 0.5]
    got2 = jax.block_until_ready(
        multi_tversky_loss(x2, t2, alpha=0.3, beta=0.7, gamma=1.5, weights=wts))
    ref2 = jax.block_until_ready(_reference(x2, t2, 0.3, 0.7, 1.5, wts))
    assert np.allclose(np.asarray(got2), np.asarray(ref2), rtol=1e-5, atol=1e-5), (
        float(got2), float(ref2))

    # Test 3: force the multi-tile spatial accumulation path (grid = (2, 4)).
    k5, k6 = jax.random.split(k3)
    x3 = jax.random.uniform(k5, (2, 4, 128, 128), dtype=jnp.float32)
    t3 = jax.random.randint(k6, (2, 128, 128), 0, 4, dtype=jnp.int32)
    got3 = jax.block_until_ready(multi_tversky_loss(x3, t3, max_rows_per_tile=32))
    ref3 = jax.block_until_ready(_reference(x3, t3, 0.5, 0.5, 1.0))
    assert np.allclose(np.asarray(got3), np.asarray(ref3), rtol=1e-5, atol=1e-5), (
        float(got3), float(ref3))

    # Test 4: bfloat16 inputs stay bf16 inside the kernel (half HBM traffic).
    x4 = x1.astype(jnp.bfloat16)
    got4 = jax.block_until_ready(multi_tversky_loss(x4, t1))
    ref4 = jax.block_until_ready(_reference(x4, t1, 0.5, 0.5, 1.0))
    assert np.allclose(np.asarray(got4), np.asarray(ref4), rtol=1e-5, atol=1e-5), (
        float(got4), float(ref4))

    # Test 5: reduction='none' returns the per-batch weighted loss vector.
    got5 = jax.block_until_ready(multi_tversky_loss(x1, t1, reduction="none"))
    ref5 = jax.block_until_ready(_reference(x1, t1, 0.5, 0.5, 1.0, reduction="none"))
    assert got5.shape == (2,)
    assert np.allclose(np.asarray(got5), np.asarray(ref5), rtol=1e-5, atol=1e-5)

    print("KERNEL_OK")
</pallas_src>

<mosaic_0001>
module attributes {stable_mosaic.version = 11 : i64} {
  func.func @_tversky_kernel(%arg0: i32, %arg1: i32, %arg2: memref<2x2x2x128xf32, #tpu.memory_space<vmem>>, %arg3: memref<2x1x2x128xi8, #tpu.memory_space<vmem>>, %arg4: memref<1x2x2xf32, #tpu.memory_space<vmem>>, %arg5: memref<2x2x128xf32, #tpu.memory_space<vmem>>, %arg6: memref<2x2x128xf32, #tpu.memory_space<vmem>>, %arg7: memref<2x2x128xf32, #tpu.memory_space<vmem>>) attributes {dimension_semantics = [#tpu.dimension_semantics<parallel>, #tpu.dimension_semantics<arbitrary>], iteration_bounds = array<i64: 2, 1>, scalar_prefetch = 0 : i64, scratch_operands = 3 : i64, tpu.core_type = #tpu.core_type<tc>, window_params = [{transform_indices = @transform_0, window_bounds = array<i64: 2, 2, 2, 128>}, {transform_indices = @transform_1, window_bounds = array<i64: 2, 1, 2, 128>}, {transform_indices = @transform_2, window_bounds = array<i64: 1, 2, 2>}]} {
    %c0_i32 = arith.constant 0 : i32
    %0 = arith.cmpi eq, %arg1, %c0_i32 : i32
    %1 = arith.extui %0 : i1 to i32
    %c0_i32_0 = arith.constant 0 : i32
    %2 = arith.cmpi ne, %1, %c0_i32_0 : i32
    scf.if %2 {
      %cst_57 = arith.constant 0.000000e+00 : f32
      %80 = vector.broadcast %cst_57 : f32 to vector<2x2x128xf32>
      %c0_58 = arith.constant 0 : index
      %c0_59 = arith.constant 0 : index
      %c0_60 = arith.constant 0 : index
      %81 = vector.load %arg5[%c0_58, %c0_59, %c0_60] : memref<2x2x128xf32, #tpu.memory_space<vmem>>, vector<2x2x128xf32>
      tpu.vector_store %arg5[%c0_58, %c0_59, %c0_60], %80 {strides = array<i32>} : memref<2x2x128xf32, #tpu.memory_space<vmem>>, vector<2x2x128xf32>,
      %cst_61 = arith.constant 0.000000e+00 : f32
      %82 = vector.broadcast %cst_61 : f32 to vector<2x2x128xf32>
      %c0_62 = arith.constant 0 : index
      %c0_63 = arith.constant 0 : index
      %c0_64 = arith.constant 0 : index
      %83 = vector.load %arg6[%c0_62, %c0_63, %c0_64] : memref<2x2x128xf32, #tpu.memory_space<vmem>>, vector<2x2x128xf32>
      tpu.vector_store %arg6[%c0_62, %c0_63, %c0_64], %82 {strides = array<i32>} : memref<2x2x128xf32, #tpu.memory_space<vmem>>, vector<2x2x128xf32>,
      %cst_65 = arith.constant 0.000000e+00 : f32
      %84 = vector.broadcast %cst_65 : f32 to vector<2x2x128xf32>
      %c0_66 = arith.constant 0 : index
      %c0_67 = arith.constant 0 : index
      %c0_68 = arith.constant 0 : index
      %85 = vector.load %arg7[%c0_66, %c0_67, %c0_68] : memref<2x2x128xf32, #tpu.memory_space<vmem>>, vector<2x2x128xf32>
      tpu.vector_store %arg7[%c0_66, %c0_67, %c0_68], %84 {strides = array<i32>} : memref<2x2x128xf32, #tpu.memory_space<vmem>>, vector<2x2x128xf32>,
    } else {
    }
    %c0 = arith.constant 0 : index
    %c0_1 = arith.constant 0 : index
    %c0_2 = arith.constant 0 : index
    %c0_3 = arith.constant 0 : index
    %3 = vector.load %arg3[%c0, %c0_1, %c0_2, %c0_3] : memref<2x1x2x128xi8, #tpu.memory_space<vmem>>, vector<2x1x2x128xi8>
    %4 = vector.shape_cast %3 : vector<2x1x2x128xi8> to vector<2x2x128xi8>
    %5 = arith.extsi %4 : vector<2x2x128xi8> to vector<2x2x128xi32>
    %c2_i32 = arith.constant 2 : i32
    %6 = arith.muli %arg0, %c2_i32 : i32
    %c0_4 = arith.constant 0 : index
    %c0_5 = arith.constant 0 : index
    %c0_6 = arith.constant 0 : index
    %c0_7 = arith.constant 0 : index
    %7 = vector.load %arg2[%c0_4, %c0_5, %c0_6, %c0_7] : memref<2x2x2x128xf32, #tpu.memory_space<vmem>>, vector<2x1x2x128xf32>
    %8 = vector.shape_cast %7 : vector<2x1x2x128xf32> to vector<2x2x128xf32>
    %cst = arith.constant 5.000000e-01 : f32
    %9 = vector.broadcast %cst : f32 to vector<2x2x128xf32>
    %10 = arith.cmpf ogt, %8, %9 : vector<2x2x128xf32>
    %c0_i32_8 = arith.constant 0 : i32
    %11 = arith.addi %6, %c0_i32_8 : i32
    %12 = vector.broadcast %11 : i32 to vector<2x2x128xi32>
    %13 = arith.cmpi eq, %5, %12 : vector<2x2x128xi32>
    %14 = arith.andi %10, %13 : vector<2x2x128xi1>
    %c0_9 = arith.constant 0 : index
    %c0_10 = arith.constant 0 : index
    %c0_11 = arith.constant 0 : index
    %15 = vector.load %arg5[%c0_9, %c0_10, %c0_11] : memref<2x2x128xf32, #tpu.memory_space<vmem>>, vector<1x2x128xf32>
    %16 = vector.shape_cast %15 : vector<1x2x128xf32> to vector<2x128xf32>
    %17 = arith.extui %14 : vector<2x2x128xi1> to vector<2x2x128xi32>
    %18 = arith.sitofp %17 : vector<2x2x128xi32> to vector<2x2x128xf32>
    %cst_12 = arith.constant dense<0.000000e+00> : vector<2x128xf32>
    %19 = vector.multi_reduction <add>, %18, %cst_12 [1] : vector<2x2x128xf32> to vector<2x128xf32>
    %20 = arith.addf %16, %19 : vector<2x128xf32>
    %c0_13 = arith.constant 0 : index
    %c0_14 = arith.constant 0 : index
    %c0_15 = arith.constant 0 : index
    %21 = vector.load %arg5[%c0_13, %c0_14, %c0_15] : memref<2x2x128xf32, #tpu.memory_space<vmem>>, vector<1x2x128xf32>
    %22 = vector.shape_cast %21 : vector<1x2x128xf32> to vector<2x128xf32>
    %23 = vector.shape_cast %20 : vector<2x128xf32> to vector<1x2x128xf32>
    tpu.vector_store %arg5[%c0_13, %c0_14, %c0_15], %23 {strides = array<i32>} : memref<2x2x128xf32, #tpu.memory_space<vmem>>, vector<1x2x128xf32>,
    %c0_16 = arith.constant 0 : index
    %c0_17 = arith.constant 0 : index
    %c0_18 = arith.constant 0 : index
    %24 = vector.load %arg6[%c0_16, %c0_17, %c0_18] : memref<2x2x128xf32, #tpu.memory_space<vmem>>, vector<1x2x128xf32>
    %25 = vector.shape_cast %24 : vector<1x2x128xf32> to vector<2x128xf32>
    %26 = arith.extui %10 : vector<2x2x128xi1> to vector<2x2x128xi32>
    %27 = arith.sitofp %26 : vector<2x2x128xi32> to vector<2x2x128xf32>
    %cst_19 = arith.constant dense<0.000000e+00> : vector<2x128xf32>
    %28 = vector.multi_reduction <add>, %27, %cst_19 [1] : vector<2x2x128xf32> to vector<2x128xf32>
    %29 = arith.addf %25, %28 : vector<2x128xf32>
    %c0_20 = arith.constant 0 : index
    %c0_21 = arith.constant 0 : index
    %c0_22 = arith.constant 0 : index
    %30 = vector.load %arg6[%c0_20, %c0_21, %c0_22] : memref<2x2x128xf32, #tpu.memory_space<vmem>>, vector<1x2x128xf32>
    %31 = vector.shape_cast %30 : vector<1x2x128xf32> to vector<2x128xf32>
    %32 = vector.shape_cast %29 : vector<2x128xf32> to vector<1x2x128xf32>
    tpu.vector_store %arg6[%c0_20, %c0_21, %c0_22], %32 {strides = array<i32>} : memref<2x2x128xf32, #tpu.memory_space<vmem>>, vector<1x2x128xf32>,
    %c0_23 = arith.constant 0 : index
    %c0_24 = arith.constant 0 : index
    %c0_25 = arith.constant 0 : index
    %33 = vector.load %arg7[%c0_23, %c0_24, %c0_25] : memref<2x2x128xf32, #tpu.memory_space<vmem>>, vector<1x2x128xf32>
    %34 = vector.shape_cast %33 : vector<1x2x128xf32> to vector<2x128xf32>
    %35 = arith.extui %13 : vector<2x2x128xi1> to vector<2x2x128xi32>
    %36 = arith.sitofp %35 : vector<2x2x128xi32> to vector<2x2x128xf32>
    %cst_26 = arith.constant dense<0.000000e+00> : vector<2x128xf32>
    %37 = vector.multi_reduction <add>, %36, %cst_26 [1] : vector<2x2x128xf32> to vector<2x128xf32>
    %38 = arith.addf %34, %37 : vector<2x128xf32>
    %c0_27 = arith.constant 0 : index
    %c0_28 = arith.constant 0 : index
    %c0_29 = arith.constant 0 : index
    %39 = vector.load %arg7[%c0_27, %c0_28, %c0_29] : memref<2x2x128xf32, #tpu.memory_space<vmem>>, vector<1x2x128xf32>
    %40 = vector.shape_cast %39 : vector<1x2x128xf32> to vector<2x128xf32>
    %41 = vector.shape_cast %38 : vector<2x128xf32> to vector<1x2x128xf32>
    tpu.vector_store %arg7[%c0_27, %c0_28, %c0_29], %41 {strides = array<i32>} : memref<2x2x128xf32, #tpu.memory_space<vmem>>, vector<1x2x128xf32>,
    %c0_30 = arith.constant 0 : index
    %c1 = arith.constant 1 : index
    %c0_31 = arith.constant 0 : index
    %c0_32 = arith.constant 0 : index
    %42 = vector.load %arg2[%c0_30, %c1, %c0_31, %c0_32] : memref<2x2x2x128xf32, #tpu.memory_space<vmem>>, vector<2x1x2x128xf32>
    %43 = vector.shape_cast %42 : vector<2x1x2x128xf32> to vector<2x2x128xf32>
    %cst_33 = arith.constant 5.000000e-01 : f32
    %44 = vector.broadcast %cst_33 : f32 to vector<2x2x128xf32>
    %45 = arith.cmpf ogt, %43, %44 : vector<2x2x128xf32>
    %c1_i32 = arith.constant 1 : i32
    %46 = arith.addi %6, %c1_i32 : i32
    %47 = vector.broadcast %46 : i32 to vector<2x2x128xi32>
    %48 = arith.cmpi eq, %5, %47 : vector<2x2x128xi32>
    %49 = arith.andi %45, %48 : vector<2x2x128xi1>
    %c1_34 = arith.constant 1 : index
    %c0_35 = arith.constant 0 : index
    %c0_36 = arith.constant 0 : index
    %50 = vector.load %arg5[%c1_34, %c0_35, %c0_36] : memref<2x2x128xf32, #tpu.memory_space<vmem>>, vector<1x2x128xf32>
    %51 = vector.shape_cast %50 : vector<1x2x128xf32> to vector<2x128xf32>
    %52 = arith.extui %49 : vector<2x2x128xi1> to vector<2x2x128xi32>
    %53 = arith.sitofp %52 : vector<2x2x128xi32> to vector<2x2x128xf32>
    %cst_37 = arith.constant dense<0.000000e+00> : vector<2x128xf32>
    %54 = vector.multi_reduction <add>, %53, %cst_37 [1] : vector<2x2x128xf32> to vector<2x128xf32>
    %55 = arith.addf %51, %54 : vector<2x128xf32>
    %c1_38 = arith.constant 1 : index
    %c0_39 = arith.constant 0 : index
    %c0_40 = arith.constant 0 : index
    %56 = vector.load %arg5[%c1_38, %c0_39, %c0_40] : memref<2x2x128xf32, #tpu.memory_space<vmem>>, vector<1x2x128xf32>
    %57 = vector.shape_cast %56 : vector<1x2x128xf32> to vector<2x128xf32>
    %58 = vector.shape_cast %55 : vector<2x128xf32> to vector<1x2x128xf32>
    tpu.vector_store %arg5[%c1_38, %c0_39, %c0_40], %58 {strides = array<i32>} : memref<2x2x128xf32, #tpu.memory_space<vmem>>, vector<1x2x128xf32>,
    %c1_41 = arith.constant 1 : index
    %c0_42 = arith.constant 0 : index
    %c0_43 = arith.constant 0 : index
    %59 = vector.load %arg6[%c1_41, %c0_42, %c0_43] : memref<2x2x128xf32, #tpu.memory_space<vmem>>, vector<1x2x128xf32>
    %60 = vector.shape_cast %59 : vector<1x2x128xf32> to vector<2x128xf32>
    %61 = arith.extui %45 : vector<2x2x128xi1> to vector<2x2x128xi32>
    %62 = arith.sitofp %61 : vector<2x2x128xi32> to vector<2x2x128xf32>
    %cst_44 = arith.constant dense<0.000000e+00> : vector<2x128xf32>
    %63 = vector.multi_reduction <add>, %62, %cst_44 [1] : vector<2x2x128xf32> to vector<2x128xf32>
    %64 = arith.addf %60, %63 : vector<2x128xf32>
    %c1_45 = arith.constant 1 : index
    %c0_46 = arith.constant 0 : index
    %c0_47 = arith.constant 0 : index
    %65 = vector.load %arg6[%c1_45, %c0_46, %c0_47] : memref<2x2x128xf32, #tpu.memory_space<vmem>>, vector<1x2x128xf32>
    %66 = vector.shape_cast %65 : vector<1x2x128xf32> to vector<2x128xf32>
    %67 = vector.shape_cast %64 : vector<2x128xf32> to vector<1x2x128xf32>
    tpu.vector_store %arg6[%c1_45, %c0_46, %c0_47], %67 {strides = array<i32>} : memref<2x2x128xf32, #tpu.memory_space<vmem>>, vector<1x2x128xf32>,
    %c1_48 = arith.constant 1 : index
    %c0_49 = arith.constant 0 : index
    %c0_50 = arith.constant 0 : index
    %68 = vector.load %arg7[%c1_48, %c0_49, %c0_50] : memref<2x2x128xf32, #tpu.memory_space<vmem>>, vector<1x2x128xf32>
    %69 = vector.shape_cast %68 : vector<1x2x128xf32> to vector<2x128xf32>
    %70 = arith.extui %48 : vector<2x2x128xi1> to vector<2x2x128xi32>
    %71 = arith.sitofp %70 : vector<2x2x128xi32> to vector<2x2x128xf32>
    %cst_51 = arith.constant dense<0.000000e+00> : vector<2x128xf32>
    %72 = vector.multi_reduction <add>, %71, %cst_51 [1] : vector<2x2x128xf32> to vector<2x128xf32>
    %73 = arith.addf %69, %72 : vector<2x128xf32>
    %c1_52 = arith.constant 1 : index
    %c0_53 = arith.constant 0 : index
    %c0_54 = arith.constant 0 : index
    %74 = vector.load %arg7[%c1_52, %c0_53, %c0_54] : memref<2x2x128xf32, #tpu.memory_space<vmem>>, vector<1x2x128xf32>
    %75 = vector.shape_cast %74 : vector<1x2x128xf32> to vector<2x128xf32>
    %76 = vector.shape_cast %73 : vector<2x128xf32> to vector<1x2x128xf32>
    tpu.vector_store %arg7[%c1_52, %c0_53, %c0_54], %76 {strides = array<i32>} : memref<2x2x128xf32, #tpu.memory_space<vmem>>, vector<1x2x128xf32>,
    %c0_i32_55 = arith.constant 0 : i32
    %77 = arith.cmpi eq, %arg1, %c0_i32_55 : i32
    %78 = arith.extui %77 : i1 to i32
    %c0_i32_56 = arith.constant 0 : i32
    %79 = arith.cmpi ne, %78, %c0_i32_56 : i32
    scf.if %79 {
      %c0_57 = arith.constant 0 : index
      %c0_58 = arith.constant 0 : index
      %c0_59 = arith.constant 0 : index
      %80 = vector.load %arg5[%c0_57, %c0_58, %c0_59] : memref<2x2x128xf32, #tpu.memory_space<vmem>>, vector<2x2x128xf32>
      %cst_60 = arith.constant dense<0.000000e+00> : vector<2x2xf32>
      %81 = vector.multi_reduction <add>, %80, %cst_60 [2] : vector<2x2x128xf32> to vector<2x2xf32>
      %c0_61 = arith.constant 0 : index
      %c0_62 = arith.constant 0 : index
      %c0_63 = arith.constant 0 : index
      %82 = vector.load %arg6[%c0_61, %c0_62, %c0_63] : memref<2x2x128xf32, #tpu.memory_space<vmem>>, vector<2x2x128xf32>
      %cst_64 = arith.constant dense<0.000000e+00> : vector<2x2xf32>
      %83 = vector.multi_reduction <add>, %82, %cst_64 [2] : vector<2x2x128xf32> to vector<2x2xf32>
      %c0_65 = arith.constant 0 : index
      %c0_66 = arith.constant 0 : index
      %c0_67 = arith.constant 0 : index
      %84 = vector.load %arg7[%c0_65, %c0_66, %c0_67] : memref<2x2x128xf32, #tpu.memory_space<vmem>>, vector<2x2x128xf32>
      %cst_68 = arith.constant dense<0.000000e+00> : vector<2x2xf32>
      %85 = vector.multi_reduction <add>, %84, %cst_68 [2] : vector<2x2x128xf32> to vector<2x2xf32>
      %86 = arith.subf %83, %81 : vector<2x2xf32>
      %87 = arith.subf %85, %81 : vector<2x2xf32>
      %cst_69 = arith.constant 5.000000e-01 : f32
      %88 = vector.broadcast %cst_69 : f32 to vector<2x2xf32>
      %89 = arith.mulf %88, %86 : vector<2x2xf32>
      %90 = arith.addf %81, %89 : vector<2x2xf32>
      %cst_70 = arith.constant 5.000000e-01 : f32
      %91 = vector.broadcast %cst_70 : f32 to vector<2x2xf32>
      %92 = arith.mulf %91, %87 : vector<2x2xf32>
      %93 = arith.addf %90, %92 : vector<2x2xf32>
      %cst_71 = arith.constant 9.99999997E-7 : f32
      %94 = vector.broadcast %cst_71 : f32 to vector<2x2xf32>
      %95 = arith.addf %93, %94 : vector<2x2xf32>
      %96 = arith.divf %81, %95 : vector<2x2xf32>
      %cst_72 = arith.constant 1.000000e+00 : f32
      %97 = vector.broadcast %cst_72 : f32 to vector<2x2xf32>
      %98 = arith.subf %97, %96 : vector<2x2xf32>
      %99 = vector.shape_cast %98 : vector<2x2xf32> to vector<1x2x2xf32>
      %c0_73 = arith.constant 0 : index
      %c0_74 = arith.constant 0 : index
      %c0_75 = arith.constant 0 : index
      %100 = vector.load %arg4[%c0_73, %c0_74, %c0_75] : memref<1x2x2xf32, #tpu.memory_space<vmem>>, vector<1x2x2xf32>
      tpu.vector_store %arg4[%c0_73, %c0_74, %c0_75], %99 {strides = array<i32>} : memref<1x2x2xf32, #tpu.memory_space<vmem>>, vector<1x2x2xf32>,
    } else {
    }
    return
  }
  func.func @transform_0(%arg0: i32, %arg1: i32) -> (i32, i32, i32, i32) {
    %c0_i32 = arith.constant 0 : i32
    %c0_i32_0 = arith.constant 0 : i32
    %c0_i32_1 = arith.constant 0 : i32
    return %c0_i32, %arg0, %arg1, %c0_i32_0 : i32, i32, i32, i32
  }
  func.func @transform_1(%arg0: i32, %arg1: i32) -> (i32, i32, i32, i32) {
    %c0_i32 = arith.constant 0 : i32
    %c0_i32_0 = arith.constant 0 : i32
    %c0_i32_1 = arith.constant 0 : i32
    %c0_i32_2 = arith.constant 0 : i32
    return %c0_i32, %c0_i32_0, %arg1, %c0_i32_1 : i32, i32, i32, i32
  }
  func.func @transform_2(%arg0: i32, %arg1: i32) -> (i32, i32, i32) {
    %c0_i32 = arith.constant 0 : i32
    %c0_i32_0 = arith.constant 0 : i32
    %c0_i32_1 = arith.constant 0 : i32
    return %arg0, %c0_i32, %c0_i32_0 : i32, i32, i32
  }
}

</mosaic_0001>

<llo_original>
// kernel: tpu_custom_call.1
$region0: #{tpu_custom_call.1}
  #allocation0 [shape = 'u32[]', space=smem, size = 0x4, offset = 0x4, fixed_abs, tag = 'smem constant byte address 0x4 - core index']
  #allocation1 [shape = 'u32[72,128]{1,0:T(1,128)}', space=vmem, size = 0x9000, scoped, tag = 'internal scratch']
  #allocation2 [shape = 'f32[2,2,128]{2,1,0:T(2,128)}', space=vmem, size = 0x800, scoped, tag = 'scratch operand']
  #allocation3 [shape = 'f32[2,2,128]{2,1,0:T(2,128)}', space=vmem, size = 0x800, scoped, tag = 'scratch operand']
  #allocation4 [shape = 'f32[2,2,128]{2,1,0:T(2,128)}', space=vmem, size = 0x800, scoped, tag = 'scratch operand']
  #allocation11 [shape = 's32[]', space=sflag, size = 0x4, offset = 0, fixed_abs, tag = 'sflag constant byte address 0x0 - dummy sync flag']
  %s0 = inlined_call_operand.hbm [shape: f32[2,4,2,128], index: 0, kind: input, shape index: {}]
  %s1 = inlined_call_operand.hbm [shape: s8[2,1,2,128], index: 1, kind: input, shape index: {}]
  %s2 = inlined_call_operand.hbm [shape: f32[2,2,2], index: 2, kind: output, shape index: {}]
  %s3 = sld [smem:[#allocation0]]
  $region57: #{tpu_custom_call.1} parent=0
    _
  %s5 = ssub.s32 1, %s3
  %s6 = scalar_select 0, %s5, %s3
  $region1: #{tpu_custom_call.1} parent=0
    #allocation5 [shape = 'u8[8192]{0}', space=vmem, size = 0x2000, scoped, tag = 'input window, operand 0']
    #allocation6 [shape = 's32[2]{0}', space=sflag, size = 0x8, scoped, tag = 'scoped memory for tpu_custom_call.1']
    #allocation7 [shape = 's32[2]{0}', space=sflag, size = 0x8, scoped, tag = 'scoped memory for tpu_custom_call.1']
    #allocation8 [shape = 'u8[1024]{0}', space=vmem, size = 0x400, scoped, tag = 'input window, operand 1, single buffered']
    #allocation9 [shape = 's32[1]{0}', space=sflag, size = 0x4, scoped, tag = 'scoped memory for tpu_custom_call.1']
    #allocation10 [shape = 'u8[2048]{0}', space=vmem, size = 0x800, scoped, tag = 'output window, operand 0']
    %7 = vsyncpa [#allocation6], 0
    %s8 = scalar_lea.sflag [#allocation6], 1
    %9 = vsyncpa %s8, 0
    %10 = vsyncpa [#allocation9], 0
    %11 = vsyncpa [#allocation7], 0
    %s12 = scalar_lea.sflag [#allocation7], 1
    %13 = vsyncpa %s12, 0
    loop: start=0, step=1, limit=4
    $region2: #{tpu_custom_call.1} parent=1 // loop_pre_header
      _
    $region3: #{tpu_custom_call.1} parent=1 // loop_header
      %s15 = sphi 0, %s19
      %p16 = scmp.ge.s32.totalorder %s15, 4
      %s22 = sphi 0, %s34
      %s23 = sphi 0, %s30
      %s24 = sphi 0, %s22
      %s25 = sphi 0, %s23
      %s26 = sphi 0, %s24
      %s27 = sphi 0, %s25
      %s39 = sphi 0, %s41
      %s42 = sphi 0, %s39
      %s43 = sphi 0, %s42
      %s59 = sphi 0, %s43
      %s65 = sphi 0, %s67
      %s68 = sphi 0, %s65
      %s69 = sphi 0, %s68
      %s85 = sphi 0, %s69
      %s91 = sphi 0, %s93
      %s94 = sphi 0, %s91
      %s95 = sphi 0, %s94
      %s111 = sphi 0, %s95
    $region4: #{tpu_custom_call.1} parent=1 // loop_header_branch
      %18 = sbr.rel (%p16) target = $region8
    $region5: #{tpu_custom_call.1} parent=1 // loop_body
      %s20 = ssub.s32 %s15, 1
      %s21 = ssub.s32 %s15, 2
      %s28 = sadd.s32 1, %s23
      %p29 = scmp.ge.s32.totalorder %s28, 1
      %s30 = scalar_select %p29, 0, %s28
      %s31 = sadd.s32 1, %s22
      %s32 = scalar_select %p29, %s31, %s22
      %p33 = scmp.ge.s32.totalorder %s32, 2
      %s34 = scalar_select %p33, 0, %s32
      %s35 = ssub.s32 %s22, %s34
      %s36 = ssub.s32 %s23, %s30
      %s37 = sor.u32 %s35, %s36
      %p38 = scmp.eq.s32.totalorder %s37, 0
      %s40 = sadd.s32 %s39, 1
      %s41 = scalar_select %p38, %s39, %s40
      %p44 = pneg %p38
      %p45 = scmp.eq.s32.totalorder %s15, 1
      %p46 = por %p44, %p45
      %p47 = scmp.ne.s32.totalorder %s39, %s42
      %p48 = scmp.eq.s32.totalorder %s15, 0
      %p49 = por %p47, %p48
      %p50 = scmp.ne.s32.totalorder %s39, %s42
      %p51 = scmp.eq.s32.totalorder %s20, 1
      %p52 = por %p50, %p51
      %p53 = scmp.ne.s32.totalorder %s42, %s43
      %p54 = scmp.eq.s32.totalorder %s20, 0
      %p55 = por %p53, %p54
      %p56 = scmp.ne.s32.totalorder %s42, %s43
      %p57 = scmp.eq.s32.totalorder %s21, 1
      %p58 = por %p56, %p57
      %p60 = scmp.ne.s32.totalorder %s43, %s59
      %p61 = scmp.eq.s32.totalorder %s21, 0
      %p62 = por %p60, %p61
      %s63 = ssub.s32 %s23, %s30
      %p64 = scmp.eq.s32.totalorder %s63, 0
      %s66 = sadd.s32 %s65, 1
      %s67 = scalar_select %p64, %s65, %s66
      %p70 = pneg %p64
      %p71 = scmp.eq.s32.totalorder %s15, 1
      %p72 = por %p70, %p71
      %p73 = scmp.ne.s32.totalorder %s65, %s68
      %p74 = scmp.eq.s32.totalorder %s15, 0
      %p75 = por %p73, %p74
      %p76 = scmp.ne.s32.totalorder %s65, %s68
      %p77 = scmp.eq.s32.totalorder %s20, 1
      %p78 = por %p76, %p77
      %p79 = scmp.ne.s32.totalorder %s68, %s69
      %p80 = scmp.eq.s32.totalorder %s20, 0
      %p81 = por %p79, %p80
      %p82 = scmp.ne.s32.totalorder %s68, %s69
      %p83 = scmp.eq.s32.totalorder %s21, 1
      %p84 = por %p82, %p83
      %p86 = scmp.ne.s32.totalorder %s69, %s85
      %p87 = scmp.eq.s32.totalorder %s21, 0
      %p88 = por %p86, %p87
      %s89 = ssub.s32 %s22, %s34
      %p90 = scmp.eq.s32.totalorder %s89, 0
      %s92 = sadd.s32 %s91, 1
      %s93 = scalar_select %p90, %s91, %s92
      %p96 = pneg %p90
      %p97 = scmp.eq.s32.totalorder %s15, 1
      %p98 = por %p96, %p97
      %p99 = scmp.ne.s32.totalorder %s91, %s94
      %p100 = scmp.eq.s32.totalorder %s15, 0
      %p101 = por %p99, %p100
      %p102 = scmp.ne.s32.totalorder %s91, %s94
      %p103 = scmp.eq.s32.totalorder %s20, 1
      %p104 = por %p102, %p103
      %p105 = scmp.ne.s32.totalorder %s94, %s95
      %p106 = scmp.eq.s32.totalorder %s20, 0
      %p107 = por %p105, %p106
      %p108 = scmp.ne.s32.totalorder %s94, %s95
      %p109 = scmp.eq.s32.totalorder %s21, 1
      %p110 = por %p108, %p109
      %p112 = scmp.ne.s32.totalorder %s95, %s111
      %p113 = scmp.eq.s32.totalorder %s21, 0
      %p114 = por %p112, %p113
      %p115 = scmp.le.s32.totalorder 1, %s15
      %p116 = scmp.lt.s32.totalorder %s15, 3
      %p117 = pnand %p115, %p116
      %p118 = pneg %p117
      // Predicated region
      $region9: #{tpu_custom_call.1} parent=5 // pred_check
        _
      $region10: #{tpu_custom_call.1} parent=5 // pred_check_branch
        %120 = sbr.rel (%p117) target = $region12
      $region11: #{tpu_custom_call.1} parent=5 // pred_region
        %s121 = ssub.s32 %s15, 1
        // Predicated region
        $region13: #{tpu_custom_call.1} parent=11 // pred_check
          %p122 = pneg %p81
        $region14: #{tpu_custom_call.1} parent=11 // pred_check_branch
          %124 = sbr.rel (%p122) target = $region16
        $region15: #{tpu_custom_call.1} parent=11 // pred_region
          %126 = vsyncadd [#allocation9], 0
          %s127 = scalar_lea.hbm %s1, %s25
          %s128 = sshll.u32 %s127, 4
          %s129 = int_to_ptr.hbm [resolvable:$true] %s128
          %s130 = sshll.u32 [#allocation8], 4
          %s131 = int_to_ptr.vmem [resolvable:$true] %s130
          %136 = dma.hbm_to_vmem [thread:$0]  %s129, 32, %s131, [#allocation9], 16, 16, 1
        $region16: #{tpu_custom_call.1} parent=11 // pred_fallthru
          _
      $region12: #{tpu_custom_call.1} parent=5 // pred_fallthru
        _
      %p137 = scmp.lt.s32.totalorder %s15, 2
      // Predicated region
      $region17: #{tpu_custom_call.1} parent=5 // pred_check
        %p138 = pneg %p137
      $region18: #{tpu_custom_call.1} parent=5 // pred_check_branch
        %140 = sbr.rel (%p138) target = $region20
      $region19: #{tpu_custom_call.1} parent=5 // pred_region
        // Predicated region
        $region21: #{tpu_custom_call.1} parent=19 // pred_check
          %p141 = pneg %p49
        $region22: #{tpu_custom_call.1} parent=19 // pred_check_branch
          %143 = sbr.rel (%p141) target = $region24
        $region23: #{tpu_custom_call.1} parent=19 // pred_region
          #allocation12 [shape = 'u32[6]{0}', space=smem, size = 0x18, scoped, tag = 'DMA stride descriptor']
          %s144 = sand.u32 %s39, 1
          %s145 = scalar_lea.sflag [#allocation6], %s144
          %s146 = sand.u32 %s39, 1
          %s147 = smul.addr %s146, 8
          %s148 = scalar_lea.vmem [#allocation5], %s147
          %s149 = smul.u32 2, %s22
          %151 = vsyncadd %s145, 0
          %s152 = sadd.s32 %s23, %s149
          %s153 = smul.addr %s152, 2
          %s154 = scalar_lea.hbm %s0, %s153
          %s156 = sshll.u32 1, 14
          %s157 = sxor.u32 4294967295, %s156
          %s159 = sld [smem:[#allocation0]]
          %s160 = sadd.s32 2, %s159
          %s162 = sshll.u32 7, 26
          %s163 = sxor.u32 4294967295, %s162
          %s164 = sand.u32 0, %s163
          %s165 = sshll.u32 %s160, 26
          %s166 = sor.u32 %s164, %s165
          %s167 = sshll.u32 %s154, 4
          %s168 = int_to_ptr.hbm [resolvable:$true] %s167
          %s169 = sshll.u32 %s148, 4
          %s170 = int_to_ptr.vmem [resolvable:$true] %s169
          %176 = sst [smem:[#allocation12]] 128
          %s177 = scalar_lea.smem [#allocation12], 1
          %178 = sst [smem:[%s177]] 64
          %s179 = scalar_lea.smem [#allocation12], 2
          %180 = sst [smem:[%s179]] 2
          %s181 = scalar_lea.smem [#allocation12], 3
          %182 = sst [smem:[%s181]] 32
          %s183 = scalar_lea.smem [#allocation12], 4
          %184 = sst [smem:[%s183]] 32
          %s185 = scalar_lea.smem [#allocation12], 5
          %186 = sst [smem:[%s185]] 2
          %188 = dma.general %s168, 128, %s170, %s145, [#allocation11], [#allocation12], %s166, 0
        $region24: #{tpu_custom_call.1} parent=19 // pred_fallthru
          _
      $region20: #{tpu_custom_call.1} parent=5 // pred_fallthru
        _
      %p189 = scmp.le.s32.totalorder 1, %s15
      %p190 = scmp.lt.s32.totalorder %s15, 3
      %p191 = pnand %p189, %p190
      %p192 = pneg %p191
      // Predicated region
      $region25: #{tpu_custom_call.1} parent=5 // pred_check
        _
      $region26: #{tpu_custom_call.1} parent=5 // pred_check_branch
        %194 = sbr.rel (%p191) target = $region28
      $region27: #{tpu_custom_call.1} parent=5 // pred_region
        %s195 = ssub.s32 %s15, 1
        %s196 = sand.u32 %s42, 1
        %s197 = scalar_lea.sflag [#allocation6], %s196
        %s198 = sand.u32 %s42, 1
        %s199 = smul.addr %s198, 8
        %s200 = scalar_lea.vmem [#allocation5], %s199
        // Predicated region
        $region29: #{tpu_custom_call.1} parent=27 // pred_check
          %p201 = pneg %p55
        $region30: #{tpu_custom_call.1} parent=27 // pred_check_branch
          %203 = sbr.rel (%p201) target = $region32
        $region31: #{tpu_custom_call.1} parent=27 // pred_region
          %205 = dma.done %s197, 128
        $region32: #{tpu_custom_call.1} parent=27 // pred_fallthru
          _
        // Predicated region
        $region33: #{tpu_custom_call.1} parent=27 // pred_check
          %p206 = pneg %p81
        $region34: #{tpu_custom_call.1} parent=27 // pred_check_branch
          %208 = sbr.rel (%p206) target = $region36
        $region35: #{tpu_custom_call.1} parent=27 // pred_region
          %210 = dma.done [#allocation9], 32
        $region36: #{tpu_custom_call.1} parent=27 // pred_fallthru
          _
        %s211 = sand.u32 %s42, 1
        %s212 = scalar_lea.sflag [#allocation6], %s211
        %s213 = sand.u32 %s42, 1
        %s214 = smul.addr %s213, 8
        %s215 = scalar_lea.vmem [#allocation5], %s214
        %p216 = pneg %p55
        %p217 = pneg %p52
        %p218 = pneg %p81
        %p219 = pneg %p78
        %p220 = pneg %p107
        %p221 = pneg %p104
        %s222 = sand.u32 %s94, 1
        %s223 = scalar_lea.sflag [#allocation7], %s222
        %s224 = sand.u32 %s94, 1
        %s225 = smul.addr %s224, 2
        %s226 = scalar_lea.vmem [#allocation10], %s225
        %s227 = smul.u32 2, %s24
        %p228 = scmp.eq.s32.totalorder %s25, 0
        // Predicated region
        $region37: #{tpu_custom_call.1} parent=27 // pred_check
          %p229 = pneg %p228
        $region38: #{tpu_custom_call.1} parent=27 // pred_check_branch
          %231 = sbr.rel (%p229) target = $region40
        $region39: #{tpu_custom_call.1} parent=27 // pred_region
          %232 = vst [vmem:[#allocation2] sm:$0x3] 0.0
          %233 = vst [vmem:[#allocation2 + $0x2] sm:$0x3] 0.0
          %234 = vst [vmem:[#allocation3] sm:$0x3] 0.0
          %235 = vst [vmem:[#allocation3 + $0x2] sm:$0x3] 0.0
          %236 = vst [vmem:[#allocation4] sm:$0x3] 0.0
          %237 = vst [vmem:[#allocation4 + $0x2] sm:$0x3] 0.0
        $region40: #{tpu_custom_call.1} parent=27 // pred_fallthru
          _
        %v238 = vld [vmem:[#allocation8] sm:$0x1]
        %v239 = vld [vmem:[#allocation8 + $0x1] sm:$0x1]
        %v240 = vunpack.c.0.s8 %v238
        %v241 = vunpack.c.0.s8 %v239
        %s242 = smul.u32 %s24, 2
        %v243 = vld [vmem:[%s200] sm:$0x3]
        %v244 = vld [vmem:[%s200 + $0x4] sm:$0x3]
        %vm245 = vcmp.gt.f32.partialorder %v243, 0.5
        %vm246 = vcmp.gt.f32.partialorder %v244, 0.5
        %v247 = vstv %s242
        %vm248 = vcmp.eq.s32.totalorder %v240, %v247
        %vm249 = vcmp.eq.s32.totalorder %v241, %v247
        %vm250 = vmand %vm245, %vm248
        %vm251 = vmand %vm246, %vm249
        %v252 = vld [vmem:[#allocation2] sm:$0x3]
        %v253 = vsel %vm250, 1, 0
        %v254 = vsel %vm251, 1, 0
        %v255 = vcvt.s32.f32 %v253
        %v256 = vcvt.s32.f32 %v254
        %vm257 = vcmask 1041408
        %v258 = vsel %vm257, %v255, 0.0
        %v259 = vrot.slane %v258, 4
        %v260 = vadd.f32 %v258, %v259
        %v261 = vrot.slane %v260, 2
        %v262 = vadd.f32 %v260, %v261
        %v263 = vrot.slane %v262, 1
        %v264 = vadd.f32 %v262, %v263
        %v265 = vsel %vm257, %v256, 0.0
        %v266 = vrot.slane %v265, 4
        %v267 = vadd.f32 %v265, %v266
        %v268 = vrot.slane %v267, 2
        %v269 = vadd.f32 %v267, %v268
        %v270 = vrot.slane %v269, 1
        %v271 = vadd.f32 %v269, %v270
        %vm274 = vcmask 1041409
        %v275 = vsel %vm274, %v271, %v264
        %v277 = vadd.f32 %v252, %v275
        %278 = vst [vmem:[#allocation2] sm:$0x3] %v277
        %v279 = vld [vmem:[#allocation3] sm:$0x3]
        %v280 = vsel %vm245, 1, 0
        %v281 = vsel %vm246, 1, 0
        %v282 = vcvt.s32.f32 %v280
        %v283 = vcvt.s32.f32 %v281
        %v284 = vsel %vm257, %v282, 0.0
        %v285 = vrot.slane %v284, 4
        %v286 = vadd.f32 %v284, %v285
        %v287 = vrot.slane %v286, 2
        %v288 = vadd.f32 %v286, %v287
        %v289 = vrot.slane %v288, 1
        %v290 = vadd.f32 %v288, %v289
        %v291 = vsel %vm257, %v283, 0.0
        %v292 = vrot.slane %v291, 4
        %v293 = vadd.f32 %v291, %v292
        %v294 = vrot.slane %v293, 2
        %v295 = vadd.f32 %v293, %v294
        %v296 = vrot.slane %v295, 1
        %v297 = vadd.f32 %v295, %v296
        %v300 = vsel %vm274, %v297, %v290
        %v302 = vadd.f32 %v279, %v300
        %303 = vst [vmem:[#allocation3] sm:$0x3] %v302
        %v304 = vld [vmem:[#allocation4] sm:$0x3]
        %v305 = vsel %vm248, 1, 0
        %v306 = vsel %vm249, 1, 0
        %v307 = vcvt.s32.f32 %v305
        %v308 = vcvt.s32.f32 %v306
        %v309 = vsel %vm257, %v307, 0.0
        %v310 = vrot.slane %v309, 4
        %v311 = vadd.f32 %v309, %v310
        %v312 = vrot.slane %v311, 2
        %v313 = vadd.f32 %v311, %v312
        %v314 = vrot.slane %v313, 1
        %v315 = vadd.f32 %v313, %v314
        %v316 = vsel %vm257, %v308, 0.0
        %v317 = vrot.slane %v316, 4
        %v318 = vadd.f32 %v316, %v317
        %v319 = vrot.slane %v318, 2
        %v320 = vadd.f32 %v318, %v319
        %v321 = vrot.slane %v320, 1
        %v322 = vadd.f32 %v320, %v321
        %v325 = vsel %vm274, %v322, %v315
        %v327 = vadd.f32 %v304, %v325
        %328 = vst [vmem:[#allocation4] sm:$0x3] %v327
        %s329 = scalar_lea.vmem %s200, 2 [#allocation5]
        %v330 = vld [vmem:[%s329] sm:$0x3]
        %v331 = vld [vmem:[%s329 + $0x4] sm:$0x3]
        %vm332 = vcmp.gt.f32.partialorder %v330, 0.5
        %vm333 = vcmp.gt.f32.partialorder %v331, 0.5
        %s334 = sadd.s32 %s242, 1
        %v335 = vstv %s334
        %vm336 = vcmp.eq.s32.totalorder %v240, %v335
        %vm337 = vcmp.eq.s32.totalorder %v241, %v335
        %vm338 = vmand %vm332, %vm336
        %vm339 = vmand %vm333, %vm337
        %s340 = scalar_lea.vmem [#allocation2], 2
        %v341 = vld [vmem:[%s340] sm:$0x3]
        %v342 = vsel %vm338, 1, 0
        %v343 = vsel %vm339, 1, 0
        %v344 = vcvt.s32.f32 %v342
        %v345 = vcvt.s32.f32 %v343
        %v346 = vsel %vm257, %v344, 0.0
        %v347 = vrot.slane %v346, 4
        %v348 = vadd.f32 %v346, %v347
        %v349 = vrot.slane %v348, 2
        %v350 = vadd.f32 %v348, %v349
        %v351 = vrot.slane %v350, 1
        %v352 = vadd.f32 %v350, %v351
        %v353 = vsel %vm257, %v345, 0.0
        %v354 = vrot.slane %v353, 4
        %v355 = vadd.f32 %v353, %v354
        %v356 = vrot.slane %v355, 2
        %v357 = vadd.f32 %v355, %v356
        %v358 = vrot.slane %v357, 1
        %v359 = vadd.f32 %v357, %v358
        %v362 = vsel %vm274, %v359, %v352
        %v364 = vadd.f32 %v341, %v362
        %365 = vst [vmem:[%s340] sm:$0x3] %v364
        %s366 = scalar_lea.vmem [#allocation3], 2
        %v367 = vld [vmem:[%s366] sm:$0x3]
        %v368 = vsel %vm332, 1, 0
        %v369 = vsel %vm333, 1, 0
        %v370 = vcvt.s32.f32 %v368
        %v371 = vcvt.s32.f32 %v369
        %v372 = vsel %vm257, %v370, 0.0
        %v373 = vrot.slane %v372, 4
        %v374 = vadd.f32 %v372, %v373
        %v375 = vrot.slane %v374, 2
        %v376 = vadd.f32 %v374, %v375
        %v377 = vrot.slane %v376, 1
        %v378 = vadd.f32 %v376, %v377
        %v379 = vsel %vm257, %v371, 0.0
        %v380 = vrot.slane %v379, 4
        %v381 = vadd.f32 %v379, %v380
        %v382 = vrot.slane %v381, 2
        %v383 = vadd.f32 %v381, %v382
        %v384 = vrot.slane %v383, 1
        %v385 = vadd.f32 %v383, %v384
        %v388 = vsel %vm274, %v385, %v378
        %v390 = vadd.f32 %v367, %v388
        %391 = vst [vmem:[%s366] sm:$0x3] %v390
        %s392 = scalar_lea.vmem [#allocation4], 2
        %v393 = vld [vmem:[%s392] sm:$0x3]
        %v394 = vsel %vm336, 1, 0
        %v395 = vsel %vm337, 1, 0
        %v396 = vcvt.s32.f32 %v394
        %v397 = vcvt.s32.f32 %v395
        %v398 = vsel %vm257, %v396, 0.0
        %v399 = vrot.slane %v398, 4
        %v400 = vadd.f32 %v398, %v399
        %v401 = vrot.slane %v400, 2
        %v402 = vadd.f32 %v400, %v401
        %v403 = vrot.slane %v402, 1
        %v404 = vadd.f32 %v402, %v403
        %v405 = vsel %vm257, %v397, 0.0
        %v406 = vrot.slane %v405, 4
        %v407 = vadd.f32 %v405, %v406
        %v408 = vrot.slane %v407, 2
        %v409 = vadd.f32 %v407, %v408
        %v410 = vrot.slane %v409, 1
        %v411 = vadd.f32 %v409, %v410
        %v414 = vsel %vm274, %v411, %v404
        %v416 = vadd.f32 %v393, %v414
        %417 = vst [vmem:[%s392] sm:$0x3] %v416
        // Predicated region
        $region41: #{tpu_custom_call.1} parent=27 // pred_check
          %p418 = pneg %p228
        $region42: #{tpu_custom_call.1} parent=27 // pred_check_branch
          %420 = sbr.rel (%p418) target = $region44
        $region43: #{tpu_custom_call.1} parent=27 // pred_region
          %v421 = vld [vmem:[#allocation2] sm:$0x3]
          %v422 = vld [vmem:[#allocation2 + $0x2] sm:$0x3]
          %v423 = vsel %vm257, %v421, 0.0
          %424 = vadd.xlane.f32.xlu0 %v423
          %v425 = vpop.xlane.xlu0 %424
          %v426 = vsel %vm257, %v422, 0.0
          %427 = vadd.xlane.f32.xlu0 %v426
          %v428 = vpop.xlane.xlu0 %427
          %v429 = vld [vmem:[#allocation3] sm:$0x3]
          %v430 = vld [vmem:[#allocation3 + $0x2] sm:$0x3]
          %v431 = vsel %vm257, %v429, 0.0
          %432 = vadd.xlane.f32.xlu0 %v431
          %v433 = vpop.xlane.xlu0 %432
          %v434 = vsel %vm257, %v430, 0.0
          %435 = vadd.xlane.f32.xlu0 %v434
          %v436 = vpop.xlane.xlu0 %435
          %v437 = vld [vmem:[#allocation4] sm:$0x3]
          %v438 = vld [vmem:[#allocation4 + $0x2] sm:$0x3]
          %v439 = vsel %vm257, %v437, 0.0
          %440 = vadd.xlane.f32.xlu0 %v439
          %v441 = vpop.xlane.xlu0 %440
          %v442 = vsel %vm257, %v438, 0.0
          %443 = vadd.xlane.f32.xlu0 %v442
          %v444 = vpop.xlane.xlu0 %443
          %v445 = vsub.f32 %v433, %v425
          %v446 = vsub.f32 %v436, %v428
          %v447 = vsub.f32 %v441, %v425
          %v448 = vsub.f32 %v444, %v428
          %v449 = vmul.f32 %v445, 0.5
          %v450 = vmul.f32 %v446, 0.5
          %v451 = vadd.f32 %v425, %v449
          %v452 = vadd.f32 %v428, %v450
          %v453 = vmul.f32 %v447, 0.5
          %v454 = vmul.f32 %v448, 0.5
          %v455 = vadd.f32 %v451, %v453
          %v456 = vadd.f32 %v452, %v454
          %v457 = vadd.f32 %v455, 1e-06
          %v458 = vadd.f32 %v456, 1e-06
          %v459 = vrcp.pop %v457
          %v460 = vmul.f32 %v457, %v459
          %v461 = vsub.f32 1.0, %v460
          %v462 = vmul.f32 %v459, %v461
          %v463 = vadd.f32 %v459, %v462
          %vm464 = vweird.f32 %v457
          %vm465 = vweird.f32 %v459
          %vm466 = vmor %vm464, %vm465
          %v467 = vsel %vm466, %v459, %v463
          %v468 = vand.u32 2147483647, %v457
          %vm469 = vcmp.eq.f32.partialorder %v468, 8.507059e+37
          %v470 = vand.u32 %v457, 2147483648
          %v471 = vor.u32 1.1754944e-38, %v470
          %v472 = vsel %vm469, %v471, %v467
          %v473 = vmul.f32 %v425, %v472
          %v474 = vrcp.pop %v458
          %v475 = vmul.f32 %v458, %v474
          %v476 = vsub.f32 1.0, %v475
          %v477 = vmul.f32 %v474, %v476
          %v478 = vadd.f32 %v474, %v477
          %vm479 = vweird.f32 %v458
          %vm480 = vweird.f32 %v474
          %vm481 = vmor %vm479, %vm480
          %v482 = vsel %vm481, %v474, %v478
          %v483 = vand.u32 2147483647, %v458
          %vm484 = vcmp.eq.f32.partialorder %v483, 8.507059e+37
          %v485 = vand.u32 %v458, 2147483648
          %v486 = vor.u32 1.1754944e-38, %v485
          %v487 = vsel %vm484, %v486, %v482
          %v488 = vmul.f32 %v428, %v487
          %v489 = vsub.f32 1.0, %v473
          %v490 = vsub.f32 1.0, %v488
          %v493 = vlaneseq
          %v494 = vand.u32 %v493, 127
          %v495 = vperm.slane %v489, %v494
          %v496 = vperm.slane %v490, %v494
          %v497 = vsel %vm274, %v496, %v495
          %vm499 = vcmask 9216
          %500 = vst.msk [vmem:[%s226] sm:$0x3] %vm499, %v497
        $region44: #{tpu_custom_call.1} parent=27 // pred_fallthru
          _
        %s501 = sand.u32 %s94, 1
        %s502 = scalar_lea.sflag [#allocation7], %s501
        %s503 = sand.u32 %s94, 1
        %s504 = smul.addr %s503, 2
        %s505 = scalar_lea.vmem [#allocation10], %s504
        // Predicated region
        $region45: #{tpu_custom_call.1} parent=27 // pred_check
          %p506 = pneg %p104
        $region46: #{tpu_custom_call.1} parent=27 // pred_check_branch
          %508 = sbr.rel (%p506) target = $region48
        $region47: #{tpu_custom_call.1} parent=27 // pred_region
          %510 = vsyncadd %s502, 0
          %s511 = smul.addr %s24, 2
          %s512 = scalar_lea.hbm %s2, %s511
          %s514 = sshll.u32 %s505, 4
          %s515 = int_to_ptr.vmem [resolvable:$true] %s514
          %s516 = sshll.u32 %s512, 4
          %s517 = int_to_ptr.hbm [resolvable:$true] %s516
          %519 = dma.vmem_to_hbm [thread:$0]  %s515, 32, %s517, %s502
        $region48: #{tpu_custom_call.1} parent=27 // pred_fallthru
          _
      $region28: #{tpu_custom_call.1} parent=5 // pred_fallthru
        _
      %p520 = scmp.le.s32.totalorder 2, %s15
      // Predicated region
      $region49: #{tpu_custom_call.1} parent=5 // pred_check
        %p521 = pneg %p520
      $region50: #{tpu_custom_call.1} parent=5 // pred_check_branch
        %523 = sbr.rel (%p521) target = $region52
      $region51: #{tpu_custom_call.1} parent=5 // pred_region
        %s524 = ssub.s32 %s15, 2
        // Predicated region
        $region53: #{tpu_custom_call.1} parent=51 // pred_check
          %p525 = pneg %p110
        $region54: #{tpu_custom_call.1} parent=51 // pred_check_branch
          %527 = sbr.rel (%p525) target = $region56
        $region55: #{tpu_custom_call.1} parent=51 // pred_region
          %s528 = sand.u32 %s95, 1
          %s529 = scalar_lea.sflag [#allocation7], %s528
          %s530 = sand.u32 %s95, 1
          %s531 = smul.addr %s530, 2
          %s532 = scalar_lea.vmem [#allocation10], %s531
          %534 = dma.done %s529, 32
        $region56: #{tpu_custom_call.1} parent=51 // pred_fallthru
          _
      $region52: #{tpu_custom_call.1} parent=5 // pred_fallthru
        _
    $region6: #{tpu_custom_call.1} parent=1 // loop_footer
      %s19 = sadd.s32 1, %s15
    $region7: #{tpu_custom_call.1} parent=1 // loop_footer_branch
      %14 = sbr.rel target = $region3
    $region8: #{tpu_custom_call.1} parent=1 // loop_exit
      _
    %535 = vsyncpa [#allocation6], 1
    %s536 = scalar_lea.sflag [#allocation6], 1
    %537 = vsyncpa %s536, 1
    %538 = vsyncpa [#allocation9], 1
    %539 = vsyncpa [#allocation7], 1
    %s540 = scalar_lea.sflag [#allocation7], 1
    %541 = vsyncpa %s540, 1

</llo_original>
